<compile_context>
chip_gen: v7x
topology: tpu7x:2x2x1
jax: 0.10.0
libtpu: 0.0.40
codegen_flags: <defaults>
</compile_context>

<pallas_src>
import jax
import jax.numpy as jnp
from jax.experimental import pallas as pl
from jax.experimental.pallas import tpu as pltpu


def _conv_hardsig_kernel(w_ref, b_ref, p_ref, o_ref):
    # w_ref: (OC, K)   reshaped conv weight          (replicated)
    # b_ref: (OC, 1)   bias                          (replicated)
    # p_ref: (K, TM)   transposed im2col patch tile  (one image, one M tile)
    # o_ref: (OC, TM)  output tile -> maps straight onto NCHW layout
    y = jnp.dot(w_ref[...], p_ref[...], preferred_element_type=jnp.float32)
    y = y + b_ref[...]                              # bias broadcast over lanes
    y = jnp.clip(y + 2.0, 0.0, 6.0) * (1.0 / 6.0)   # v2=2+v1; v3=clamp; v4=/6
    o_ref[...] = y.astype(o_ref.dtype)


def _pick_m_tile(ohw: int) -> int:
    """Lane-dense M tile: multiple of 128 when tiling, else the full extent."""
    if ohw <= 512 or ohw % 128 != 0:
        return ohw
    for t in (512, 384, 256, 128):
        if ohw % t == 0:
            return t
    return ohw


def conv_hardsig(x_nchw, weight, bias):
    """Conv2d(kernel==stride, padding=0) + clamp(x+2,0,6)/6.  NCHW in/out."""
    N, C, H, W = x_nchw.shape
    OC, C_in, KH, KW = weight.shape
    assert C_in == C and KH == KW
    k = KH
    stride = k                                  # module: kernel=5, stride=5
    OH = (H - k) // stride + 1
    OW = (W - k) // stride + 1
    K = C * k * k
    OHW = OH * OW

    # Crop the trailing rows/cols a VALID conv ignores (e.g. 64 -> 60 for k=5).
    xc = x_nchw[:, :, : OH * k, : OW * k]

    # im2col in TRANSPOSED orientation: (N, K, OH*OW), K ordered (c, kh, kw),
    # M ordered (oh, ow).  Single wrapper-side data-movement op; the (OC, M)
    # kernel result then reshapes to NCHW for free (no post-kernel transpose).
    p = xc.reshape(N, C, OH, k, OW, k)
    p = p.transpose(0, 1, 3, 5, 2, 4)           # (N, C, kh, kw, OH, OW)
    p = p.reshape(N, K, OHW)

    w_mat = weight.reshape(OC, K)               # same (c, kh, kw) ordering
    b_mat = bias.reshape(OC, 1)

    tm = _pick_m_tile(OHW)
    grid = (N, OHW // tm)

    out = pl.pallas_call(
        _conv_hardsig_kernel,
        out_shape=jax.ShapeDtypeStruct((N, OC, OHW), jnp.float32),
        grid=grid,
        in_specs=[
            pl.BlockSpec((OC, K), lambda n, m: (0, 0)),          # weight
            pl.BlockSpec((OC, 1), lambda n, m: (0, 0)),          # bias
            pl.BlockSpec((None, K, tm), lambda n, m: (n, 0, m)),  # patches
        ],
        out_specs=pl.BlockSpec((None, OC, tm), lambda n, m: (n, 0, m)),
        compiler_params=pltpu.CompilerParams(
            dimension_semantics=("parallel", "parallel")),
    )(w_mat, b_mat, p)

    return out.reshape(N, OC, OH, OW)


def reference(x_nchw, weight, bias, *, stride=5):
    """Pure-JAX reference for sanity checking."""
    y = jax.lax.conv_general_dilated(
        x_nchw, weight,
        window_strides=(stride, stride),
        padding="VALID",
        dimension_numbers=("NCHW", "OIHW", "NCHW"),
    ) + bias.reshape(1, -1, 1, 1)
    return jnp.clip(y + 2.0, 0.0, 6.0) / 6.0


if __name__ == "__main__":
    key = jax.random.PRNGKey(0)
    kx, kw, kb = jax.random.split(key, 3)

    # Small shapes consistent with the module: C=3 fixed by the conv,
    # H=W=80 -> OH=OW=16, so OH*OW=256 is a clean multiple of 128 lanes.
    N, C, H, W = 2, 3, 80, 80
    OC, KH, KW = 7, 5, 5

    x = jax.random.normal(kx, (N, C, H, W), dtype=jnp.float32)
    # PyTorch-like init scale: U(-b, b), b = 1/sqrt(fan_in)
    fan_in = C * KH * KW
    bound = 1.0 / (fan_in ** 0.5)
    w = jax.random.uniform(kw, (OC, C, KH, KW), jnp.float32, -bound, bound)
    b = jax.random.uniform(kb, (OC,), jnp.float32, -bound, bound)

    out = conv_hardsig(x, w, b)
    out = jax.block_until_ready(out)

    ref = reference(x, w, b)
    assert out.shape == (N, OC, 16, 16), out.shape
    assert jnp.allclose(out, ref, atol=2e-5, rtol=1e-5), "mismatch vs reference"

    print("KERNEL_OK")
</pallas_src>

<mosaic_0001>
module attributes {stable_mosaic.version = 11 : i64} {
  func.func @_conv_hardsig_kernel(%arg0: i32, %arg1: i32, %arg2: memref<7x75xf32, #tpu.memory_space<vmem>>, %arg3: memref<7x1xf32, #tpu.memory_space<vmem>>, %arg4: memref<1x75x256xf32, #tpu.memory_space<vmem>>, %arg5: memref<1x7x256xf32, #tpu.memory_space<vmem>>) attributes {dimension_semantics = [#tpu.dimension_semantics<parallel>, #tpu.dimension_semantics<parallel>], iteration_bounds = array<i64: 2, 1>, scalar_prefetch = 0 : i64, scratch_operands = 0 : i64, tpu.core_type = #tpu.core_type<tc>, window_params = [{pipeline_mode = #tpu.pipeline_mode<synchronous>, transform_indices = @transform_0, window_bounds = array<i64: 7, 75>}, {pipeline_mode = #tpu.pipeline_mode<synchronous>, transform_indices = @transform_1, window_bounds = array<i64: 7, 1>}, {transform_indices = @transform_2, window_bounds = array<i64: 1, 75, 256>}, {transform_indices = @transform_3, window_bounds = array<i64: 1, 7, 256>}]} {
    %c0 = arith.constant 0 : index
    %c0_0 = arith.constant 0 : index
    %0 = vector.load %arg2[%c0, %c0_0] : memref<7x75xf32, #tpu.memory_space<vmem>>, vector<7x75xf32>
    %c0_1 = arith.constant 0 : index
    %c0_2 = arith.constant 0 : index
    %c0_3 = arith.constant 0 : index
    %1 = vector.load %arg4[%c0_1, %c0_2, %c0_3] : memref<1x75x256xf32, #tpu.memory_space<vmem>>, vector<1x75x256xf32>
    %2 = vector.shape_cast %1 : vector<1x75x256xf32> to vector<75x256xf32>
    %cst = arith.constant dense<0.000000e+00> : vector<7x256xf32>
    %3 = tpu.matmul %0, %2, %cst {dimension_numbers = #tpu.dot_dimension_numbers<[1], [0], [0], [1], [0, 0, 1, 1], [], []>} : vector<7x75xf32>, vector<75x256xf32>, vector<7x256xf32> -> vector<7x256xf32>
    %c0_4 = arith.constant 0 : index
    %c0_5 = arith.constant 0 : index
    %4 = vector.load %arg3[%c0_4, %c0_5] : memref<7x1xf32, #tpu.memory_space<vmem>>, vector<7x1xf32>
    %5 = vector.broadcast %4 : vector<7x1xf32> to vector<7x256xf32>
    %6 = arith.addf %3, %5 : vector<7x256xf32>
    %cst_6 = arith.constant 2.000000e+00 : f32
    %7 = vector.broadcast %cst_6 : f32 to vector<7x256xf32>
    %8 = arith.addf %6, %7 : vector<7x256xf32>
    %cst_7 = arith.constant 0.000000e+00 : f32
    %cst_8 = arith.constant 6.000000e+00 : f32
    %9 = vector.broadcast %cst_7 : f32 to vector<7x256xf32>
    %10 = arith.maximumf %9, %8 : vector<7x256xf32>
    %11 = vector.broadcast %cst_8 : f32 to vector<7x256xf32>
    %12 = arith.minimumf %11, %10 : vector<7x256xf32>
    %cst_9 = arith.constant 0.166666672 : f32
    %13 = vector.broadcast %cst_9 : f32 to vector<7x256xf32>
    %14 = arith.mulf %12, %13 : vector<7x256xf32>
    %c0_10 = arith.constant 0 : index
    %c0_11 = arith.constant 0 : index
    %c0_12 = arith.constant 0 : index
    %15 = vector.load %arg5[%c0_10, %c0_11, %c0_12] : memref<1x7x256xf32, #tpu.memory_space<vmem>>, vector<1x7x256xf32>
    %16 = vector.shape_cast %15 : vector<1x7x256xf32> to vector<7x256xf32>
    %17 = vector.shape_cast %14 : vector<7x256xf32> to vector<1x7x256xf32>
    tpu.vector_store %arg5[%c0_10, %c0_11, %c0_12], %17 {strides = array<i32>} : memref<1x7x256xf32, #tpu.memory_space<vmem>>, vector<1x7x256xf32>,
    return
  }
  func.func @transform_0(%arg0: i32, %arg1: i32) -> (i32, i32) {
    %c0_i32 = arith.constant 0 : i32
    %c0_i32_0 = arith.constant 0 : i32
    %c0_i32_1 = arith.constant 0 : i32
    return %c0_i32, %c0_i32_0 : i32, i32
  }
  func.func @transform_1(%arg0: i32, %arg1: i32) -> (i32, i32) {
    %c0_i32 = arith.constant 0 : i32
    %c0_i32_0 = arith.constant 0 : i32
    %c0_i32_1 = arith.constant 0 : i32
    return %c0_i32, %c0_i32_0 : i32, i32
  }
  func.func @transform_2(%arg0: i32, %arg1: i32) -> (i32, i32, i32) {
    %c0_i32 = arith.constant 0 : i32
    %c0_i32_0 = arith.constant 0 : i32
    return %arg0, %c0_i32, %arg1 : i32, i32, i32
  }
  func.func @transform_3(%arg0: i32, %arg1: i32) -> (i32, i32, i32) {
    %c0_i32 = arith.constant 0 : i32
    %c0_i32_0 = arith.constant 0 : i32
    return %arg0, %c0_i32, %arg1 : i32, i32, i32
  }
}

</mosaic_0001>

<llo_original>
// kernel: tpu_custom_call.1
$region0: #{tpu_custom_call.1}
  #allocation0 [shape = 'u32[]', space=smem, size = 0x4, offset = 0x4, fixed_abs, tag = 'smem constant byte address 0x4 - core index']
  #allocation1 [shape = 'u32[144,128]{1,0:T(1,128)}', space=vmem, size = 0x12000, scoped, tag = 'internal scratch']
  %s0 = inlined_call_operand.vmem [shape: f32[7,75], index: 0, kind: input, shape index: {}]
  %s1 = inlined_call_operand.vmem [shape: f32[7,1], index: 1, kind: input, shape index: {}]
  %s2 = inlined_call_operand.vmem [shape: f32[2,75,256], index: 2, kind: input, shape index: {}]
  %s3 = inlined_call_operand.vmem [shape: f32[2,7,256], index: 3, kind: output, shape index: {}]
  %s4 = sld [smem:[#allocation0]]
  $region45: #{tpu_custom_call.1} parent=0
    _
  %s6 = ssub.s32 1, %s4
  %s7 = scalar_select 0, %s6, %s4
  loop: start=0, step=1, limit=4
  $region2: #{tpu_custom_call.1} parent=0 // loop_pre_header
    _
  $region3: #{tpu_custom_call.1} parent=0 // loop_header
    %s9 = sphi 0, %s13
    %p10 = scmp.ge.s32.totalorder %s9, 4
    %s16 = sphi 0, %s28
    %s17 = sphi 0, %s24
    %s18 = sphi 0, %s16
    %s19 = sphi 0, %s17
    %s20 = sphi 0, %s18
    %s21 = sphi 0, %s19
    %s29 = sphi 0, %s29
    %s31 = sphi 0, %s29
    %s32 = sphi 0, %s31
    %s46 = sphi 0, %s32
    %s50 = sphi 0, %s50
    %s52 = sphi 0, %s50
    %s53 = sphi 0, %s52
    %s67 = sphi 0, %s53
    %s75 = sphi 0, %s77
    %s78 = sphi 0, %s75
    %s79 = sphi 0, %s78
    %s95 = sphi 0, %s79
    %s103 = sphi 0, %s105
    %s106 = sphi 0, %s103
    %s107 = sphi 0, %s106
    %s123 = sphi 0, %s107
  $region4: #{tpu_custom_call.1} parent=0 // loop_header_branch
    %12 = sbr.rel (%p10) target = $region8
  $region5: #{tpu_custom_call.1} parent=0 // loop_body
    %s14 = ssub.s32 %s9, 1
    %s15 = ssub.s32 %s9, 2
    %s22 = sadd.s32 1, %s17
    %p23 = scmp.ge.s32.totalorder %s22, 1
    %s24 = scalar_select %p23, 0, %s22
    %s25 = sadd.s32 1, %s16
    %s26 = scalar_select %p23, %s25, %s16
    %p27 = scmp.ge.s32.totalorder %s26, 2
    %s28 = scalar_select %p27, 0, %s26
    %s30 = sadd.s32 %s29, 1
    %p33 = scmp.eq.s32.totalorder %s9, 1
    %p34 = scmp.ne.s32.totalorder %s29, %s31
    %p35 = scmp.eq.s32.totalorder %s9, 0
    %p36 = por %p34, %p35
    %p37 = scmp.ne.s32.totalorder %s29, %s31
    %p38 = scmp.eq.s32.totalorder %s14, 1
    %p39 = por %p37, %p38
    %p40 = scmp.ne.s32.totalorder %s31, %s32
    %p41 = scmp.eq.s32.totalorder %s14, 0
    %p42 = por %p40, %p41
    %p43 = scmp.ne.s32.totalorder %s31, %s32
    %p44 = scmp.eq.s32.totalorder %s15, 1
    %p45 = por %p43, %p44
    %p47 = scmp.ne.s32.totalorder %s32, %s46
    %p48 = scmp.eq.s32.totalorder %s15, 0
    %p49 = por %p47, %p48
    %s51 = sadd.s32 %s50, 1
    %p54 = scmp.eq.s32.totalorder %s9, 1
    %p55 = scmp.ne.s32.totalorder %s50, %s52
    %p56 = scmp.eq.s32.totalorder %s9, 0
    %p57 = por %p55, %p56
    %p58 = scmp.ne.s32.totalorder %s50, %s52
    %p59 = scmp.eq.s32.totalorder %s14, 1
    %p60 = por %p58, %p59
    %p61 = scmp.ne.s32.totalorder %s52, %s53
    %p62 = scmp.eq.s32.totalorder %s14, 0
    %p63 = por %p61, %p62
    %p64 = scmp.ne.s32.totalorder %s52, %s53
    %p65 = scmp.eq.s32.totalorder %s15, 1
    %p66 = por %p64, %p65
    %p68 = scmp.ne.s32.totalorder %s53, %s67
    %p69 = scmp.eq.s32.totalorder %s15, 0
    %p70 = por %p68, %p69
    %s71 = ssub.s32 %s16, %s28
    %s72 = ssub.s32 %s17, %s24
    %s73 = sor.u32 %s71, %s72
    %p74 = scmp.eq.s32.totalorder %s73, 0
    %s76 = sadd.s32 %s75, 1
    %s77 = scalar_select %p74, %s75, %s76
    %p80 = pneg %p74
    %p81 = scmp.eq.s32.totalorder %s9, 1
    %p82 = por %p80, %p81
    %p83 = scmp.ne.s32.totalorder %s75, %s78
    %p84 = scmp.eq.s32.totalorder %s9, 0
    %p85 = por %p83, %p84
    %p86 = scmp.ne.s32.totalorder %s75, %s78
    %p87 = scmp.eq.s32.totalorder %s14, 1
    %p88 = por %p86, %p87
    %p89 = scmp.ne.s32.totalorder %s78, %s79
    %p90 = scmp.eq.s32.totalorder %s14, 0
    %p91 = por %p89, %p90
    %p92 = scmp.ne.s32.totalorder %s78, %s79
    %p93 = scmp.eq.s32.totalorder %s15, 1
    %p94 = por %p92, %p93
    %p96 = scmp.ne.s32.totalorder %s79, %s95
    %p97 = scmp.eq.s32.totalorder %s15, 0
    %p98 = por %p96, %p97
    %s99 = ssub.s32 %s16, %s28
    %s100 = ssub.s32 %s17, %s24
    %s101 = sor.u32 %s99, %s100
    %p102 = scmp.eq.s32.totalorder %s101, 0
    %s104 = sadd.s32 %s103, 1
    %s105 = scalar_select %p102, %s103, %s104
    %p108 = pneg %p102
    %p109 = scmp.eq.s32.totalorder %s9, 1
    %p110 = por %p108, %p109
    %p111 = scmp.ne.s32.totalorder %s103, %s106
    %p112 = scmp.eq.s32.totalorder %s9, 0
    %p113 = por %p111, %p112
    %p114 = scmp.ne.s32.totalorder %s103, %s106
    %p115 = scmp.eq.s32.totalorder %s14, 1
    %p116 = por %p114, %p115
    %p117 = scmp.ne.s32.totalorder %s106, %s107
    %p118 = scmp.eq.s32.totalorder %s14, 0
    %p119 = por %p117, %p118
    %p120 = scmp.ne.s32.totalorder %s106, %s107
    %p121 = scmp.eq.s32.totalorder %s15, 1
    %p122 = por %p120, %p121
    %p124 = scmp.ne.s32.totalorder %s107, %s123
    %p125 = scmp.eq.s32.totalorder %s15, 0
    %p126 = por %p124, %p125
    %p127 = scmp.le.s32.totalorder 1, %s9
    %p128 = scmp.lt.s32.totalorder %s9, 3
    %p129 = pnand %p127, %p128
    %p130 = pneg %p129
    // Predicated region
    $region9: #{tpu_custom_call.1} parent=5 // pred_check
      _
    $region10: #{tpu_custom_call.1} parent=5 // pred_check_branch
      %132 = sbr.rel (%p129) target = $region12
    $region11: #{tpu_custom_call.1} parent=5 // pred_region
      %s133 = ssub.s32 %s9, 1
      // Predicated region
      $region13: #{tpu_custom_call.1} parent=11 // pred_check
        %p134 = pneg %p42
      $region14: #{tpu_custom_call.1} parent=11 // pred_check_branch
        %136 = sbr.rel (%p134) target = $region16
      $region15: #{tpu_custom_call.1} parent=11 // pred_region
        _
      $region16: #{tpu_custom_call.1} parent=11 // pred_fallthru
        _
      // Predicated region
      $region17: #{tpu_custom_call.1} parent=11 // pred_check
        %p137 = pneg %p63
      $region18: #{tpu_custom_call.1} parent=11 // pred_check_branch
        %139 = sbr.rel (%p137) target = $region20
      $region19: #{tpu_custom_call.1} parent=11 // pred_region
        _
      $region20: #{tpu_custom_call.1} parent=11 // pred_fallthru
        _
    $region12: #{tpu_custom_call.1} parent=5 // pred_fallthru
      _
    %p140 = scmp.lt.s32.totalorder %s9, 2
    // Predicated region
    $region21: #{tpu_custom_call.1} parent=5 // pred_check
      %p141 = pneg %p140
    $region22: #{tpu_custom_call.1} parent=5 // pred_check_branch
      %143 = sbr.rel (%p141) target = $region24
    $region23: #{tpu_custom_call.1} parent=5 // pred_region
      // Predicated region
      $region25: #{tpu_custom_call.1} parent=23 // pred_check
        %p144 = pneg %p85
      $region26: #{tpu_custom_call.1} parent=23 // pred_check_branch
        %146 = sbr.rel (%p144) target = $region28
      $region27: #{tpu_custom_call.1} parent=23 // pred_region
        %s147 = smul.u32 2, %s17
        %p148 = scmp.lt.s32.totalorder %s16, 1
        %s149 = scalar_select %p148, %s16, 1
        %p150 = scmp.lt.s32.totalorder %s147, 1
        %s151 = scalar_select %p150, %s147, 1
        %s152 = smul.addr %s149, 20
        %s153 = sadd.s32 %s151, %s152
        %s154 = smul.addr %s153, 8
        %s155 = scalar_lea.vmem %s2, %s154
        %s156 = smul.u32 2, %s17
      $region28: #{tpu_custom_call.1} parent=23 // pred_fallthru
        _
    $region24: #{tpu_custom_call.1} parent=5 // pred_fallthru
      _
    %p157 = scmp.le.s32.totalorder 1, %s9
    %p158 = scmp.lt.s32.totalorder %s9, 3
    %p159 = pnand %p157, %p158
    %p160 = pneg %p159
    // Predicated region
    $region29: #{tpu_custom_call.1} parent=5 // pred_check
      _
    $region30: #{tpu_custom_call.1} parent=5 // pred_check_branch
      %162 = sbr.rel (%p159) target = $region32
    $region31: #{tpu_custom_call.1} parent=5 // pred_region
      %s163 = ssub.s32 %s9, 1
      %p164 = pneg %p42
      %p165 = pneg %p39
      %p166 = pneg %p63
      %p167 = pneg %p60
      %s168 = smul.u32 2, %s19
      %p169 = scmp.lt.s32.totalorder %s18, 1
      %s170 = scalar_select %p169, %s18, 1
      %p171 = scmp.lt.s32.totalorder %s168, 1
      %s172 = scalar_select %p171, %s168, 1
      %s173 = smul.addr %s170, 20
      %s174 = sadd.s32 %s172, %s173
      %s175 = smul.addr %s174, 8
      %s176 = scalar_lea.vmem %s2, %s175
      %p177 = pneg %p91
      %p178 = pneg %p88
      %p179 = pneg %p119
      %p180 = pneg %p116
      %s181 = smul.u32 2, %s19
      %p182 = scmp.lt.s32.totalorder %s18, 1
      %s183 = scalar_select %p182, %s18, 1
      %p184 = scmp.lt.s32.totalorder %s181, 1
      %s185 = scalar_select %p184, %s181, 1
      %s186 = smul.addr %s183, 2
      %s187 = sadd.s32 %s185, %s186
      %s188 = smul.addr %s187, 8
      %s189 = scalar_lea.vmem %s3, %s188
      %s190 = smul.u32 2, %s19
      %p191 = scmp.lt.s32.totalorder %s18, 1
      %s192 = scalar_select %p191, %s18, 1
      %p193 = scmp.lt.s32.totalorder %s190, 1
      %s194 = scalar_select %p193, %s190, 1
      %s195 = smul.addr %s192, 20
      %s196 = sadd.s32 %s194, %s195
      %s197 = smul.addr %s196, 8
      %s198 = scalar_lea.vmem %s2, %s197
      %s199 = smul.u32 2, %s19
      %s200 = smul.u32 2, %s19
      %p201 = scmp.lt.s32.totalorder %s18, 1
      %s202 = scalar_select %p201, %s18, 1
      %p203 = scmp.lt.s32.totalorder %s200, 1
      %s204 = scalar_select %p203, %s200, 1
      %s205 = smul.addr %s202, 2
      %s206 = sadd.s32 %s204, %s205
      %s207 = smul.addr %s206, 8
      %s208 = scalar_lea.vmem %s3, %s207
      %s209 = smul.u32 2, %s19
      %v210 = vld [vmem:[%s0] sm:$0x7f]
      %v211 = vld [vmem:[%s198] sm:$0xff]
      %v212 = vld [vmem:[%s198 + $0x8] sm:$0xff]
      %v213 = vld [vmem:[%s198 + $0x10] sm:$0xff]
      %v214 = vld [vmem:[%s198 + $0x18] sm:$0xff]
      %v215 = vld [vmem:[%s198 + $0x20] sm:$0xff]
      %v216 = vld [vmem:[%s198 + $0x28] sm:$0xff]
      %v217 = vld [vmem:[%s198 + $0x30] sm:$0xff]
      %v218 = vld [vmem:[%s198 + $0x38] sm:$0xff]
      %v219 = vld [vmem:[%s198 + $0x40] sm:$0xff]
      %v220 = vld [vmem:[%s198 + $0x48] sm:$0xff]
      %v221 = vld [vmem:[%s198 + $0x50] sm:$0xff]
      %v222 = vld [vmem:[%s198 + $0x58] sm:$0xff]
      %v223 = vld [vmem:[%s198 + $0x60] sm:$0xff]
      %v224 = vld [vmem:[%s198 + $0x68] sm:$0xff]
      %v225 = vld [vmem:[%s198 + $0x70] sm:$0xff]
      %v226 = vld [vmem:[%s198 + $0x78] sm:$0xff]
      %v227 = vld [vmem:[%s198 + $0x80] sm:$0xff]
      %v228 = vld [vmem:[%s198 + $0x88] sm:$0xff]
      %v229 = vld [vmem:[%s198 + $0x90] sm:$0x7]
      %v230 = vld [vmem:[%s198 + $0x98] sm:$0x7]
      %v231 = vld [vmem:[%s1] sm:$0x7f]
      %233 = vset.pattern.permute.xlu0 0
      %234 = vperm.xlu0 %233, %v231
      %v235 = vpop.permute.xlu0 %234
      %vm237 = vcmask 613376
      %v239 = vsel %vm237, %v210, 0
      %vm241 = vcmask 1042432
      %v243 = vsel %vm241, %v229, 0
      %v246 = vsel %vm241, %v230, 0
      %248 = vmatprep.subr.mxu0 %v212
      %249 = vmatpush1.msra.mxu0 %v211
      %250 = vmatprep.subr.mxu0 %v214
      %251 = vmatpush1.msra.mxu0 %v213
      %252 = vmatprep.subr.mxu0 %v216
      %253 = vmatpush1.msra.mxu0 %v215
      %254 = vmatprep.subr.mxu0 %v218
      %255 = vmatpush1.msra.mxu0 %v217
      %256 = vmatprep.subr.mxu0 %v220
      %257 = vmatpush1.msra.mxu0 %v219
      %258 = vmatprep.subr.mxu0 %v222
      %259 = vmatpush1.msra.mxu0 %v221
      %260 = vmatprep.subr.mxu0 %v224
      %261 = vmatpush1.msra.mxu0 %v223
      %262 = vmatprep.subr.mxu0 %v226
      %263 = vmatpush1.msra.mxu0 %v225
      %264 = vmatprep.subr.mxu0 %v228
      %265 = vmatpush1.msra.mxu0 %v227
      %266 = vmatprep.subr.mxu0 %v246
      %267 = vmatpush1.msra.mxu0 %v243
      %268 = vmatprep.subr.mxu0 0.0
      %269 = vmatpush1.msra.mxu0 0.0
      %270 = vmatprep.subr.mxu0 0.0
      %271 = vmatpush1.msra.mxu0 0.0
      %272 = vmatprep.subr.mxu0 0.0
      %273 = vmatpush1.msra.mxu0 0.0
      %274 = vmatprep.subr.mxu0 0.0
      %275 = vmatpush1.msra.mxu0 0.0
      %276 = vmatprep.subr.mxu0 0.0
      %277 = vmatpush1.msra.mxu0 0.0
      %278 = vmatprep.subr.mxu0 0.0
      %279 = vmatpush1.msra.mxu0 0.0
      %280 = vmatprep.subr.mxu0 0.0
      %281 = vmatpush1.msra.mxu0 0.0
      %282 = vmatprep.subr.mxu0 0.0
      %283 = vmatpush1.msra.mxu0 0.0
      %284 = vmatprep.subr.mxu0 0.0
      %285 = vmatpush1.msra.mxu0 0.0
      %286 = vmatprep.subr.mxu0 0.0
      %287 = vmatpush1.msra.mxu0 0.0
      %288 = vmatprep.subr.mxu0 0.0
      %289 = vmatpush1.msra.mxu0 0.0
      %290 = vmatprep.subr.mxu0 0.0
      %291 = vmatpush1.msra.mxu0 0.0
      %292 = vmatprep.subr.mxu0 0.0
      %293 = vmatpush1.msra.mxu0 0.0
      %294 = vmatprep.subr.mxu0 0.0
      %295 = vmatpush1.msra.mxu0 0.0
      %296 = vmatprep.subr.mxu0 0.0
      %297 = vmatpush1.msra.mxu0 0.0
      %298 = vmatprep.subr.mxu0 0.0
      %299 = vmatpush1.msra.mxu0 0.0
      %300 = vmatprep.subr.mxu0 0.0
      %301 = vmatpush1.msra.mxu0 0.0
      %302 = vmatprep.subr.mxu0 0.0
      %303 = vmatpush1.msra.mxu0 0.0
      %304 = vmatprep.subr.mxu0 0.0
      %305 = vmatpush1.msra.mxu0 0.0
      %306 = vmatprep.subr.mxu0 0.0
      %307 = vmatpush1.msra.mxu0 0.0
      %308 = vmatprep.subr.mxu0 0.0
      %309 = vmatpush1.msra.mxu0 0.0
      %310 = vmatprep.subr.mxu0 0.0
      %311 = vmatpush1.msra.mxu0 0.0
      %312 = vmatprep.mubr.f32.mxu0 0.0
      %313 = vmatmul.mubr.f32.gmra.mrb[0].mxu0 %v239
      %v314 = vpop.f32.mrb[0].mxu0
      %v315 = vadd.f32 %v235, %v314
      %v316 = vpop.f32.mrb[0].mxu0
      %v317 = vadd.f32 %v235, %v316
      %318 = vdwg.mxu0
      %v319 = vadd.f32 %v315, 2.0
      %v320 = vadd.f32 %v317, 2.0
      %v321 = vmax.f32 %v319, 0.0
      %v322 = vmax.f32 %v320, 0.0
      %v323 = vmin.f32 %v321, 6.0
      %v324 = vmin.f32 %v322, 6.0
      %v325 = vmul.f32 %v323, 0.16666667
      %v326 = vmul.f32 %v324, 0.16666667
      %327 = vst [vmem:[%s208] sm:$0x7f] %v325
      %328 = vst [vmem:[%s208 + $0x8] sm:$0x7f] %v326
      %s329 = smul.u32 2, %s19
      %p330 = scmp.lt.s32.totalorder %s18, 1
      %s331 = scalar_select %p330, %s18, 1
      %p332 = scmp.lt.s32.totalorder %s329, 1
      %s333 = scalar_select %p332, %s329, 1
      %s334 = smul.addr %s331, 2
      %s335 = sadd.s32 %s333, %s334
      %s336 = smul.addr %s335, 8
      %s337 = scalar_lea.vmem %s3, %s336
      // Predicated region
      $region33: #{tpu_custom_call.1} parent=31 // pred_check
        %p338 = pneg %p116
      $region34: #{tpu_custom_call.1} parent=31 // pred_check_branch
        %340 = sbr.rel (%p338) target = $region36
      $region35: #{tpu_custom_call.1} parent=31 // pred_region
        %s341 = smul.u32 2, %s19
      $region36: #{tpu_custom_call.1} parent=31 // pred_fallthru
        _
    $region32: #{tpu_custom_call.1} parent=5 // pred_fallthru
      _
    %p342 = scmp.le.s32.totalorder 2, %s9
    // Predicated region
    $region37: #{tpu_custom_call.1} parent=5 // pred_check
      %p343 = pneg %p342
    $region38: #{tpu_custom_call.1} parent=5 // pred_check_branch
      %345 = sbr.rel (%p343) target = $region40
    $region39: #{tpu_custom_call.1} parent=5 // pred_region
      %s346 = ssub.s32 %s9, 2
      // Predicated region
      $region41: #{tpu_custom_call.1} parent=39 // pred_check
        %p347 = pneg %p122
      $region42: #{tpu_custom_call.1} parent=39 // pred_check_branch
        %349 = sbr.rel (%p347) target = $region44
      $region43: #{tpu_custom_call.1} parent=39 // pred_region
        %s350 = smul.u32 2, %s21
        %p351 = scmp.lt.s32.totalorder %s20, 1
        %s352 = scalar_select %p351, %s20, 1
        %p353 = scmp.lt.s32.totalorder %s350, 1
        %s354 = scalar_select %p353, %s350, 1
        %s355 = smul.addr %s352, 2
        %s356 = sadd.s32 %s354, %s355
        %s357 = smul.addr %s356, 8
        %s358 = scalar_lea.vmem %s3, %s357
      $region44: #{tpu_custom_call.1} parent=39 // pred_fallthru
        _
    $region40: #{tpu_custom_call.1} parent=5 // pred_fallthru
      _
  $region6: #{tpu_custom_call.1} parent=0 // loop_footer
    %s13 = sadd.s32 1, %s9
  $region7: #{tpu_custom_call.1} parent=0 // loop_footer_branch
    %8 = sbr.rel target = $region3
  $region8: #{tpu_custom_call.1} parent=0 // loop_exit
    _

</llo_original>
